<compile_context>
chip_gen: v6e
topology: v6e:2x2x1
jax: 0.10.0
libtpu: 0.0.40
codegen_flags: <defaults>
</compile_context>

<pallas_src>
import functools

import numpy as np
import jax
import jax.numpy as jnp
from jax.experimental import pallas as pl
from jax.experimental.pallas import tpu as pltpu

LANE = 128


def _round_up(x, m):
    return ((x + m - 1) // m) * m


# ----------------------------------------------------------------------------- kernel

def _aug_kernel(n_kps, n_poses, params_ref, det_in_ref, pose_in_ref,
                det_out_ref, pose_out_ref):
    # Scalar params live in SMEM; hoist all reads once.
    m00 = params_ref[0]; m01 = params_ref[1]; m02 = params_ref[2]
    m10 = params_ref[3]; m11 = params_ref[4]; m12 = params_ref[5]
    frame_w = params_ref[6]; frame_h = params_ref[7]
    det_loc_j = params_ref[8]; det_wh_j = params_ref[9]; det_sc_j = params_ref[10]
    pose_sc_j = params_ref[11]; kp_loc_j = params_ref[12]; kp_sc_j = params_ref[13]

    # ------------------------------------------------- detections
    d = det_in_ref[...]                       # (16, N_pad) — one whole-tile load
    x = d[0:1, :]; y = d[1:2, :]; w = d[2:3, :]; h = d[3:4, :]
    s = d[4:5, :]
    r0 = d[5:6, :]; r1 = d[6:7, :]; r2 = d[7:8, :]; r3 = d[8:9, :]; r4 = d[9:10, :]

    # per-detection xy jitter (relative to *original* w/h, matching reference order)
    xj = w * det_loc_j
    yj = h * det_loc_j
    x = x + (xj * 2.0 * r0 - xj)
    y = y + (yj * 2.0 * r1 - yj)

    # per-detection wh jitter (also relative to original w/h)
    wj = w * det_wh_j
    hj = h * det_wh_j
    w = w + (wj * 2.0 * r2 - wj)
    h = h + (hj * 2.0 * r3 - hj)

    # score jitter + clamp [0, 1]
    s = jnp.clip(s * (1.0 + (det_sc_j * 2.0 * r4 - det_sc_j)), 0.0, 1.0)

    # Axis-aligned bbox of the 4 transformed corners.
    # Corner x coords = tx0 + {0, ax, bx, ax+bx}; min/max distribute over the
    # independent contributions ax = m00*w and bx = m01*h (same for y).
    tx0 = m00 * x + m01 * y + m02
    ty0 = m10 * x + m11 * y + m12
    ax = m00 * w; bx = m01 * h
    ay = m10 * w; by = m11 * h
    zero = jnp.zeros_like(ax)
    x_min = tx0 + jnp.minimum(ax, zero) + jnp.minimum(bx, zero)
    x_max = tx0 + jnp.maximum(ax, zero) + jnp.maximum(bx, zero)
    y_min = ty0 + jnp.minimum(ay, zero) + jnp.minimum(by, zero)
    y_max = ty0 + jnp.maximum(ay, zero) + jnp.maximum(by, zero)

    in_frame = ((x_max > 0.0) & (y_max > 0.0) &
                (x_min < frame_w) & (y_min < frame_h)).astype(jnp.float32)
    pad = jnp.zeros_like(x_min)

    # one packed, lane-dense, full-block store
    det_out_ref[...] = jnp.concatenate(
        [x_min, y_min, x_max - x_min, y_max - y_min, s, in_frame, pad, pad], axis=0)

    # ------------------------------------------------- poses
    p = pose_in_ref[...]                      # (8P, K_pad) — one whole-tile load
    P = n_poses
    kx = p[0 * P:1 * P, :]
    ky = p[1 * P:2 * P, :]
    ksc = p[2 * P:3 * P, :]
    rx = p[3 * P:4 * P, :]
    ry = p[4 * P:5 * P, :]
    rs = p[5 * P:6 * P, :]
    psc = p[6 * P:7 * P, :]
    prnd = p[7 * P:8 * P, :]

    # axis-aligned skeleton footprint per pose (cross-lane XLU reduce over valid
    # keypoint lanes only; padded lanes are masked so they cannot corrupt min/max)
    lane = jax.lax.broadcasted_iota(jnp.int32, kx.shape, 1)
    valid = lane < n_kps
    big = 1e30
    fw = (jnp.max(jnp.where(valid, kx, -big), axis=1, keepdims=True)
          - jnp.min(jnp.where(valid, kx, big), axis=1, keepdims=True))
    fh = (jnp.max(jnp.where(valid, ky, -big), axis=1, keepdims=True)
          - jnp.min(jnp.where(valid, ky, big), axis=1, keepdims=True))

    xj = fw * kp_loc_j
    yj = fh * kp_loc_j
    kx = kx + (xj * 2.0 * rx - xj)
    ky = ky + (yj * 2.0 * ry - yj)

    # keypoint score jitter + clamp
    ksc = jnp.clip(ksc * (1.0 + (kp_sc_j * 2.0 * rs - kp_sc_j)), 0.0, 1.0)

    # window-global similarity transform of keypoints
    tx = m00 * kx + m01 * ky + m02
    ty = m10 * kx + m11 * ky + m12
    kp_in_frame = (tx >= 0.0) & (ty >= 0.0) & (tx < frame_w) & (ty < frame_h)
    ksc = jnp.where(kp_in_frame, ksc, 0.0)

    # per-pose score jitter + clamp (only lane 0 carries real data; rest is padding)
    psc = jnp.clip(psc * (1.0 + (pose_sc_j * 2.0 * prnd - pose_sc_j)), 0.0, 1.0)

    # one packed, lane-dense, full-block store (4 aligned (P, K_pad) blocks)
    pose_out_ref[...] = jnp.concatenate([tx, ty, ksc, psc], axis=0)


# ----------------------------------------------------------------------------- wrapper

@functools.partial(jax.jit, static_argnames=("n_kps", "n_poses"))
def rotate_scale_translate_jitter(det_slab, pose_slab, params, *, n_kps, n_poses):
    """det_slab (16, N_pad), pose_slab (8P, K_pad), params f32[14]."""
    n_pad = det_slab.shape[1]
    k_pad = pose_slab.shape[1]
    kernel = functools.partial(_aug_kernel, n_kps, n_poses)
    # TODO(synk): for production-sized windows, add a lane-tiled grid axis
    # (>=512-lane blocks) marked "parallel" so multi-TC chips can shard it;
    # at these toy sizes a single grid-less invocation is the cheapest dispatch.
    return pl.pallas_call(
        kernel,
        out_shape=(jax.ShapeDtypeStruct((8, n_pad), jnp.float32),
                   jax.ShapeDtypeStruct((4 * n_poses, k_pad), jnp.float32)),
        in_specs=[pl.BlockSpec(memory_space=pltpu.MemorySpace.SMEM),
                  pl.BlockSpec(memory_space=pltpu.MemorySpace.VMEM),
                  pl.BlockSpec(memory_space=pltpu.MemorySpace.VMEM)],
        out_specs=(pl.BlockSpec(memory_space=pltpu.MemorySpace.VMEM),
                   pl.BlockSpec(memory_space=pltpu.MemorySpace.VMEM)),
    )(params, det_slab, pose_slab)


# ----------------------------------------------------------------------------- glue

def make_transform(r_pool, frame_w, frame_h, translate, scale, rotate):
    """Compose the window-global similarity transform (same math as skimage)."""
    c_x_upper = 3.0 * frame_w / 4.0
    c_x_lower = frame_w / 4.0
    center_x = (c_x_upper - c_x_lower) * r_pool[0] + c_x_lower
    c_y_upper = frame_h / 2.0
    c_y_lower = float(frame_h)
    center_y = (c_y_upper - c_y_lower) * r_pool[1] + c_y_lower
    angle = (rotate[1] - rotate[0]) * r_pool[2] + rotate[0]
    translate_x = (translate * 2.0 * r_pool[3] - translate) * frame_w
    translate_y = (translate * 2.0 * r_pool[4] - translate) * frame_h
    scale_factor = (scale[1] - scale[0]) * r_pool[5] + scale[0]
    theta = np.deg2rad(angle)

    def sim(s=1.0, rot=0.0, trans=(0.0, 0.0)):
        c, sn = np.cos(rot), np.sin(rot)
        return np.array([[s * c, -s * sn, trans[0]],
                         [s * sn,  s * c, trans[1]],
                         [0.0, 0.0, 1.0]], dtype=np.float64)

    t_origin = sim(trans=(-center_x, -center_y))
    t_rs = sim(s=scale_factor, rot=theta, trans=(translate_x, translate_y))
    t_base = sim(trans=(center_x, center_y))
    # skimage: (a + b).params == b.params @ a.params
    m = t_base @ t_rs @ t_origin
    return m.astype(np.float32)


# ----------------------------------------------------------------------------- numpy reference

def ref_dets(boxes, scores, rand, m, fw, fh, loc_j, wh_j, sc_j):
    boxes = boxes.astype(np.float32).copy()
    scores = scores.astype(np.float32).copy()
    xy_max = boxes[:, 2:] * loc_j
    boxes[:, :2] += xy_max * 2.0 * rand[:, :2] - xy_max
    wh_max = boxes[:, 2:] * wh_j
    boxes[:, 2:] += wh_max * 2.0 * rand[:, 2:4] - wh_max
    scores = np.clip(scores * (1.0 + (sc_j * 2.0 * rand[:, 4] - sc_j)), 0.0, 1.0)
    n = boxes.shape[0]
    corners = np.asarray(
        [[boxes[:, 0], boxes[:, 0] + boxes[:, 2], boxes[:, 0] + boxes[:, 2], boxes[:, 0]],
         [boxes[:, 1], boxes[:, 1], boxes[:, 1] + boxes[:, 3], boxes[:, 1] + boxes[:, 3]]]
    ).T.reshape(n * 4, 2)
    tc = (m @ np.concatenate([corners, np.ones((n * 4, 1), np.float32)], 1).T)[:2].T
    tc = tc.reshape(n, 4, 2)
    x_min, y_min = tc[:, :, 0].min(1), tc[:, :, 1].min(1)
    x_max, y_max = tc[:, :, 0].max(1), tc[:, :, 1].max(1)
    out = np.stack([x_min, y_min, x_max - x_min, y_max - y_min], 1)
    mask = (x_max > 0) & (y_max > 0) & (x_min < fw) & (y_min < fh)
    return out, scores, mask


def ref_poses(kps, kp_sc, p_sc, kp_rand, p_rand, m, fw, fh, psj, klj, ksj):
    kps = kps.astype(np.float32).copy()
    kp_sc = kp_sc.astype(np.float32).copy()
    p_sc = np.clip(p_sc.astype(np.float32) * (1.0 + (psj * 2.0 * p_rand - psj)), 0.0, 1.0)
    foot = np.stack([kps[:, :, 0].max(1) - kps[:, :, 0].min(1),
                     kps[:, :, 1].max(1) - kps[:, :, 1].min(1)], 1)[:, None, :] * klj
    kps = kps + (foot * 2.0 * kp_rand[:, :, :2] - foot)
    kp_sc = np.clip(kp_sc * (1.0 + (ksj * 2.0 * kp_rand[:, :, 2] - ksj)), 0.0, 1.0)
    p, k = kps.shape[:2]
    flat = kps.reshape(p * k, 2)
    t = (m @ np.concatenate([flat, np.ones((p * k, 1), np.float32)], 1).T)[:2].T
    kps = t.reshape(p, k, 2)
    in_frame = (kps[:, :, 0] >= 0) & (kps[:, :, 1] >= 0) & (kps[:, :, 0] < fw) & (kps[:, :, 1] < fh)
    kp_sc = np.where(in_frame, kp_sc, 0.0)
    return kps, kp_sc, p_sc


# ----------------------------------------------------------------------------- main

if __name__ == "__main__":
    # Module hyper-parameters
    translate = 0.1
    scale = (0.9, 1.1)
    rotate = (-15.0, 15.0)
    det_loc_jitter = 0.05
    det_wh_jitter = 0.05
    dets_score_jitter = 0.1
    pose_score_jitter = 0.1
    pose_kp_loc_jitter = 0.05
    pose_kp_score_jitter = 0.1

    frame_w, frame_h = 64.0, 48.0

    # Deterministic synthetic window data (concatenated across frames, as forward does).
    key = jax.random.PRNGKey(0)
    k0, k1, k2, k3, k4, k5, k6, k7, k8 = jax.random.split(key, 9)

    n_dets = 16            # e.g. 4 frames x 4 detections
    n_poses, n_kps = 8, 8  # e.g. 4 frames x 2 poses, 8 keypoints each

    # np.array(...) copies (np.asarray on a jax array is read-only; avoid in-place mutation).
    wh = np.array(jax.random.uniform(k0, (n_dets, 2), minval=2.0, maxval=20.0), np.float32)
    xy = np.array(jax.random.uniform(k1, (n_dets, 2)), np.float32) * np.array(
        [frame_w - 20.0, frame_h - 20.0], np.float32)
    boxes = np.concatenate([xy, wh], axis=1).astype(np.float32)
    det_scores = np.array(jax.random.uniform(k2, (n_dets,)), np.float32)

    pose_kps = np.array(jax.random.uniform(k3, (n_poses, n_kps, 2)), np.float32) * np.array(
        [frame_w, frame_h], np.float32)
    pose_kp_scores = np.array(jax.random.uniform(k4, (n_poses, n_kps)), np.float32)
    pose_scores = np.array(jax.random.uniform(k5, (n_poses,)), np.float32)

    # Random pools (torch.rand equivalents), generated deterministically with JAX.
    r_pool = np.array(jax.random.uniform(k6, (6,)), np.float32)
    det_rand = np.array(jax.random.uniform(k7, (n_dets, 5)), np.float32)
    kk0, kk1 = jax.random.split(k8)
    pose_kp_rand = np.array(jax.random.uniform(kk0, (n_poses, n_kps, 3)), np.float32)
    pose_score_rand = np.array(jax.random.uniform(kk1, (n_poses,)), np.float32)

    # Window-global similarity transform (host glue; tiny 3x3 compose, stays on host).
    m = make_transform(r_pool, frame_w, frame_h, translate, scale, rotate)

    params = np.array(
        [m[0, 0], m[0, 1], m[0, 2], m[1, 0], m[1, 1], m[1, 2],
         frame_w, frame_h,
         det_loc_jitter, det_wh_jitter, dets_score_jitter,
         pose_score_jitter, pose_kp_loc_jitter, pose_kp_score_jitter], np.float32)

    # ---- pack lane-dense input slabs (pad lanes to multiple of 128)
    n_pad = _round_up(n_dets, LANE)
    k_pad = _round_up(n_kps, LANE)
    P = n_poses

    det_slab = np.zeros((16, n_pad), np.float32)
    det_slab[0:4, :n_dets] = boxes.T
    det_slab[4, :n_dets] = det_scores
    det_slab[5:10, :n_dets] = det_rand.T

    pose_slab = np.zeros((8 * P, k_pad), np.float32)
    pose_slab[0 * P:1 * P, :n_kps] = pose_kps[:, :, 0]
    pose_slab[1 * P:2 * P, :n_kps] = pose_kps[:, :, 1]
    pose_slab[2 * P:3 * P, :n_kps] = pose_kp_scores
    pose_slab[3 * P:4 * P, :n_kps] = pose_kp_rand[:, :, 0]
    pose_slab[4 * P:5 * P, :n_kps] = pose_kp_rand[:, :, 1]
    pose_slab[5 * P:6 * P, :n_kps] = pose_kp_rand[:, :, 2]
    pose_slab[6 * P:7 * P, 0] = pose_scores
    pose_slab[7 * P:8 * P, 0] = pose_score_rand

    # ---- single fused kernel call
    det_out, pose_out = jax.block_until_ready(
        rotate_scale_translate_jitter(
            jnp.asarray(det_slab), jnp.asarray(pose_slab), jnp.asarray(params),
            n_kps=n_kps, n_poses=n_poses))

    det_out = np.asarray(det_out)
    pose_out = np.asarray(pose_out)

    boxes_out = det_out[0:4, :n_dets].T
    det_scores_out = det_out[4, :n_dets]
    det_mask_out = det_out[5, :n_dets] > 0.5

    kpx_out = pose_out[0 * P:1 * P, :n_kps]
    kpy_out = pose_out[1 * P:2 * P, :n_kps]
    kpsc_out = pose_out[2 * P:3 * P, :n_kps]
    psc_out = pose_out[3 * P:4 * P, 0]

    # TODO(synk): boolean filtering of detections by `in_frame` and re-splitting results back
    # into per-frame FrameData objects is data-dependent-shape host glue, not kernel work;
    # the kernel returns the in-frame mask instead.

    # ---- verify against a numpy port of the PyTorch forward math
    ref_b, ref_s, ref_m = ref_dets(boxes, det_scores, det_rand, m, frame_w, frame_h,
                                   det_loc_jitter, det_wh_jitter, dets_score_jitter)
    np.testing.assert_allclose(boxes_out, ref_b, rtol=1e-4, atol=5e-3)
    np.testing.assert_allclose(det_scores_out, ref_s, rtol=1e-4, atol=1e-5)
    np.testing.assert_array_equal(det_mask_out, ref_m)

    rkps, rksc, rpsc = ref_poses(pose_kps, pose_kp_scores, pose_scores, pose_kp_rand,
                                 pose_score_rand, m, frame_w, frame_h,
                                 pose_score_jitter, pose_kp_loc_jitter, pose_kp_score_jitter)
    np.testing.assert_allclose(kpx_out, rkps[:, :, 0], rtol=1e-4, atol=5e-3)
    np.testing.assert_allclose(kpy_out, rkps[:, :, 1], rtol=1e-4, atol=5e-3)
    np.testing.assert_allclose(kpsc_out, rksc, rtol=1e-4, atol=1e-3)
    np.testing.assert_allclose(psc_out, rpsc, rtol=1e-4, atol=1e-5)

    print("KERNEL_OK")
</pallas_src>

<mosaic_0001>
module attributes {stable_mosaic.version = 11 : i64} {
  func.func @_aug_kernel(%arg0: memref<14xf32, #tpu.memory_space<smem>>, %arg1: memref<16x128xf32, #tpu.memory_space<vmem>>, %arg2: memref<64x128xf32, #tpu.memory_space<vmem>>, %arg3: memref<8x128xf32, #tpu.memory_space<vmem>>, %arg4: memref<32x128xf32, #tpu.memory_space<vmem>>) attributes {dimension_semantics = [], scalar_prefetch = 0 : i64, scratch_operands = 0 : i64, tpu.core_type = #tpu.core_type<tc>} {
    %c0 = arith.constant 0 : index
    %0 = memref.load %arg0[%c0] : memref<14xf32, #tpu.memory_space<smem>>
    %c1 = arith.constant 1 : index
    %1 = memref.load %arg0[%c1] : memref<14xf32, #tpu.memory_space<smem>>
    %c2 = arith.constant 2 : index
    %2 = memref.load %arg0[%c2] : memref<14xf32, #tpu.memory_space<smem>>
    %c3 = arith.constant 3 : index
    %3 = memref.load %arg0[%c3] : memref<14xf32, #tpu.memory_space<smem>>
    %c4 = arith.constant 4 : index
    %4 = memref.load %arg0[%c4] : memref<14xf32, #tpu.memory_space<smem>>
    %c5 = arith.constant 5 : index
    %5 = memref.load %arg0[%c5] : memref<14xf32, #tpu.memory_space<smem>>
    %c6 = arith.constant 6 : index
    %6 = memref.load %arg0[%c6] : memref<14xf32, #tpu.memory_space<smem>>
    %c7 = arith.constant 7 : index
    %7 = memref.load %arg0[%c7] : memref<14xf32, #tpu.memory_space<smem>>
    %c8 = arith.constant 8 : index
    %8 = memref.load %arg0[%c8] : memref<14xf32, #tpu.memory_space<smem>>
    %c9 = arith.constant 9 : index
    %9 = memref.load %arg0[%c9] : memref<14xf32, #tpu.memory_space<smem>>
    %c10 = arith.constant 10 : index
    %10 = memref.load %arg0[%c10] : memref<14xf32, #tpu.memory_space<smem>>
    %c11 = arith.constant 11 : index
    %11 = memref.load %arg0[%c11] : memref<14xf32, #tpu.memory_space<smem>>
    %c12 = arith.constant 12 : index
    %12 = memref.load %arg0[%c12] : memref<14xf32, #tpu.memory_space<smem>>
    %c13 = arith.constant 13 : index
    %13 = memref.load %arg0[%c13] : memref<14xf32, #tpu.memory_space<smem>>
    %c0_0 = arith.constant 0 : index
    %c0_1 = arith.constant 0 : index
    %14 = vector.load %arg1[%c0_0, %c0_1] : memref<16x128xf32, #tpu.memory_space<vmem>>, vector<16x128xf32>
    %15 = vector.extract_strided_slice %14 {offsets = [0, 0], sizes = [1, 128], strides = [1, 1]} : vector<16x128xf32> to vector<1x128xf32>
    %16 = vector.extract_strided_slice %14 {offsets = [1, 0], sizes = [1, 128], strides = [1, 1]} : vector<16x128xf32> to vector<1x128xf32>
    %17 = vector.extract_strided_slice %14 {offsets = [2, 0], sizes = [1, 128], strides = [1, 1]} : vector<16x128xf32> to vector<1x128xf32>
    %18 = vector.extract_strided_slice %14 {offsets = [3, 0], sizes = [1, 128], strides = [1, 1]} : vector<16x128xf32> to vector<1x128xf32>
    %19 = vector.extract_strided_slice %14 {offsets = [4, 0], sizes = [1, 128], strides = [1, 1]} : vector<16x128xf32> to vector<1x128xf32>
    %20 = vector.extract_strided_slice %14 {offsets = [5, 0], sizes = [1, 128], strides = [1, 1]} : vector<16x128xf32> to vector<1x128xf32>
    %21 = vector.extract_strided_slice %14 {offsets = [6, 0], sizes = [1, 128], strides = [1, 1]} : vector<16x128xf32> to vector<1x128xf32>
    %22 = vector.extract_strided_slice %14 {offsets = [7, 0], sizes = [1, 128], strides = [1, 1]} : vector<16x128xf32> to vector<1x128xf32>
    %23 = vector.extract_strided_slice %14 {offsets = [8, 0], sizes = [1, 128], strides = [1, 1]} : vector<16x128xf32> to vector<1x128xf32>
    %24 = vector.extract_strided_slice %14 {offsets = [9, 0], sizes = [1, 128], strides = [1, 1]} : vector<16x128xf32> to vector<1x128xf32>
    %25 = vector.broadcast %8 : f32 to vector<1x128xf32>
    %26 = arith.mulf %17, %25 : vector<1x128xf32>
    %27 = vector.broadcast %8 : f32 to vector<1x128xf32>
    %28 = arith.mulf %18, %27 : vector<1x128xf32>
    %cst = arith.constant 2.000000e+00 : f32
    %29 = vector.broadcast %cst : f32 to vector<1x128xf32>
    %30 = arith.mulf %26, %29 : vector<1x128xf32>
    %31 = arith.mulf %30, %20 : vector<1x128xf32>
    %32 = arith.subf %31, %26 : vector<1x128xf32>
    %33 = arith.addf %15, %32 : vector<1x128xf32>
    %cst_2 = arith.constant 2.000000e+00 : f32
    %34 = vector.broadcast %cst_2 : f32 to vector<1x128xf32>
    %35 = arith.mulf %28, %34 : vector<1x128xf32>
    %36 = arith.mulf %35, %21 : vector<1x128xf32>
    %37 = arith.subf %36, %28 : vector<1x128xf32>
    %38 = arith.addf %16, %37 : vector<1x128xf32>
    %39 = vector.broadcast %9 : f32 to vector<1x128xf32>
    %40 = arith.mulf %17, %39 : vector<1x128xf32>
    %41 = vector.broadcast %9 : f32 to vector<1x128xf32>
    %42 = arith.mulf %18, %41 : vector<1x128xf32>
    %cst_3 = arith.constant 2.000000e+00 : f32
    %43 = vector.broadcast %cst_3 : f32 to vector<1x128xf32>
    %44 = arith.mulf %40, %43 : vector<1x128xf32>
    %45 = arith.mulf %44, %22 : vector<1x128xf32>
    %46 = arith.subf %45, %40 : vector<1x128xf32>
    %47 = arith.addf %17, %46 : vector<1x128xf32>
    %cst_4 = arith.constant 2.000000e+00 : f32
    %48 = vector.broadcast %cst_4 : f32 to vector<1x128xf32>
    %49 = arith.mulf %42, %48 : vector<1x128xf32>
    %50 = arith.mulf %49, %23 : vector<1x128xf32>
    %51 = arith.subf %50, %42 : vector<1x128xf32>
    %52 = arith.addf %18, %51 : vector<1x128xf32>
    %cst_5 = arith.constant 2.000000e+00 : f32
    %53 = arith.mulf %10, %cst_5 : f32
    %54 = vector.broadcast %53 : f32 to vector<1x128xf32>
    %55 = arith.mulf %54, %24 : vector<1x128xf32>
    %56 = vector.broadcast %10 : f32 to vector<1x128xf32>
    %57 = arith.subf %55, %56 : vector<1x128xf32>
    %cst_6 = arith.constant 1.000000e+00 : f32
    %58 = vector.broadcast %cst_6 : f32 to vector<1x128xf32>
    %59 = arith.addf %58, %57 : vector<1x128xf32>
    %60 = arith.mulf %19, %59 : vector<1x128xf32>
    %cst_7 = arith.constant 0.000000e+00 : f32
    %cst_8 = arith.constant 1.000000e+00 : f32
    %61 = vector.broadcast %cst_7 : f32 to vector<1x128xf32>
    %62 = arith.maximumf %61, %60 : vector<1x128xf32>
    %63 = vector.broadcast %cst_8 : f32 to vector<1x128xf32>
    %64 = arith.minimumf %63, %62 : vector<1x128xf32>
    %65 = vector.broadcast %0 : f32 to vector<1x128xf32>
    %66 = arith.mulf %65, %33 : vector<1x128xf32>
    %67 = vector.broadcast %1 : f32 to vector<1x128xf32>
    %68 = arith.mulf %67, %38 : vector<1x128xf32>
    %69 = arith.addf %66, %68 : vector<1x128xf32>
    %70 = vector.broadcast %2 : f32 to vector<1x128xf32>
    %71 = arith.addf %69, %70 : vector<1x128xf32>
    %72 = vector.broadcast %3 : f32 to vector<1x128xf32>
    %73 = arith.mulf %72, %33 : vector<1x128xf32>
    %74 = vector.broadcast %4 : f32 to vector<1x128xf32>
    %75 = arith.mulf %74, %38 : vector<1x128xf32>
    %76 = arith.addf %73, %75 : vector<1x128xf32>
    %77 = vector.broadcast %5 : f32 to vector<1x128xf32>
    %78 = arith.addf %76, %77 : vector<1x128xf32>
    %79 = vector.broadcast %0 : f32 to vector<1x128xf32>
    %80 = arith.mulf %79, %47 : vector<1x128xf32>
    %81 = vector.broadcast %1 : f32 to vector<1x128xf32>
    %82 = arith.mulf %81, %52 : vector<1x128xf32>
    %83 = vector.broadcast %3 : f32 to vector<1x128xf32>
    %84 = arith.mulf %83, %47 : vector<1x128xf32>
    %85 = vector.broadcast %4 : f32 to vector<1x128xf32>
    %86 = arith.mulf %85, %52 : vector<1x128xf32>
    %cst_9 = arith.constant 0.000000e+00 : f32
    %87 = vector.broadcast %cst_9 : f32 to vector<1x128xf32>
    %88 = arith.minimumf %80, %87 : vector<1x128xf32>
    %89 = arith.addf %71, %88 : vector<1x128xf32>
    %90 = arith.minimumf %82, %87 : vector<1x128xf32>
    %91 = arith.addf %89, %90 : vector<1x128xf32>
    %92 = arith.maximumf %80, %87 : vector<1x128xf32>
    %93 = arith.addf %71, %92 : vector<1x128xf32>
    %94 = arith.maximumf %82, %87 : vector<1x128xf32>
    %95 = arith.addf %93, %94 : vector<1x128xf32>
    %96 = arith.minimumf %84, %87 : vector<1x128xf32>
    %97 = arith.addf %78, %96 : vector<1x128xf32>
    %98 = arith.minimumf %86, %87 : vector<1x128xf32>
    %99 = arith.addf %97, %98 : vector<1x128xf32>
    %100 = arith.maximumf %84, %87 : vector<1x128xf32>
    %101 = arith.addf %78, %100 : vector<1x128xf32>
    %102 = arith.maximumf %86, %87 : vector<1x128xf32>
    %103 = arith.addf %101, %102 : vector<1x128xf32>
    %cst_10 = arith.constant 0.000000e+00 : f32
    %104 = vector.broadcast %cst_10 : f32 to vector<1x128xf32>
    %105 = arith.cmpf ogt, %95, %104 : vector<1x128xf32>
    %cst_11 = arith.constant 0.000000e+00 : f32
    %106 = vector.broadcast %cst_11 : f32 to vector<1x128xf32>
    %107 = arith.cmpf ogt, %103, %106 : vector<1x128xf32>
    %108 = arith.andi %105, %107 : vector<1x128xi1>
    %109 = vector.broadcast %6 : f32 to vector<1x128xf32>
    %110 = arith.cmpf olt, %91, %109 : vector<1x128xf32>
    %111 = arith.andi %108, %110 : vector<1x128xi1>
    %112 = vector.broadcast %7 : f32 to vector<1x128xf32>
    %113 = arith.cmpf olt, %99, %112 : vector<1x128xf32>
    %114 = arith.andi %111, %113 : vector<1x128xi1>
    %115 = arith.extui %114 : vector<1x128xi1> to vector<1x128xi32>
    %116 = arith.sitofp %115 : vector<1x128xi32> to vector<1x128xf32>
    %cst_12 = arith.constant 0.000000e+00 : f32
    %117 = vector.broadcast %cst_12 : f32 to vector<1x128xf32>
    %118 = arith.subf %95, %91 : vector<1x128xf32>
    %119 = arith.subf %103, %99 : vector<1x128xf32>
    %120 = tpu.concatenate %91, %99, %118, %119, %64, %116, %117, %117 in 0 : vector<1x128xf32>, vector<1x128xf32>, vector<1x128xf32>, vector<1x128xf32>, vector<1x128xf32>, vector<1x128xf32>, vector<1x128xf32>, vector<1x128xf32> -> vector<8x128xf32>
    %c0_13 = arith.constant 0 : index
    %c0_14 = arith.constant 0 : index
    %121 = vector.load %arg3[%c0_13, %c0_14] : memref<8x128xf32, #tpu.memory_space<vmem>>, vector<8x128xf32>
    tpu.vector_store %arg3[%c0_13, %c0_14], %120 {strides = array<i32>} : memref<8x128xf32, #tpu.memory_space<vmem>>, vector<8x128xf32>,
    %c0_15 = arith.constant 0 : index
    %c0_16 = arith.constant 0 : index
    %122 = vector.load %arg2[%c0_15, %c0_16] : memref<64x128xf32, #tpu.memory_space<vmem>>, vector<64x128xf32>
    %123 = vector.extract_strided_slice %122 {offsets = [0, 0], sizes = [8, 128], strides = [1, 1]} : vector<64x128xf32> to vector<8x128xf32>
    %124 = vector.extract_strided_slice %122 {offsets = [8, 0], sizes = [8, 128], strides = [1, 1]} : vector<64x128xf32> to vector<8x128xf32>
    %125 = vector.extract_strided_slice %122 {offsets = [16, 0], sizes = [8, 128], strides = [1, 1]} : vector<64x128xf32> to vector<8x128xf32>
    %126 = vector.extract_strided_slice %122 {offsets = [24, 0], sizes = [8, 128], strides = [1, 1]} : vector<64x128xf32> to vector<8x128xf32>
    %127 = vector.extract_strided_slice %122 {offsets = [32, 0], sizes = [8, 128], strides = [1, 1]} : vector<64x128xf32> to vector<8x128xf32>
    %128 = vector.extract_strided_slice %122 {offsets = [40, 0], sizes = [8, 128], strides = [1, 1]} : vector<64x128xf32> to vector<8x128xf32>
    %129 = vector.extract_strided_slice %122 {offsets = [48, 0], sizes = [8, 128], strides = [1, 1]} : vector<64x128xf32> to vector<8x128xf32>
    %130 = vector.extract_strided_slice %122 {offsets = [56, 0], sizes = [8, 128], strides = [1, 1]} : vector<64x128xf32> to vector<8x128xf32>
    %131 = tpu.iota {dimensions = array<i32: 1>} : vector<8x128xi32>
    %c8_i32 = arith.constant 8 : i32
    %132 = vector.broadcast %c8_i32 : i32 to vector<8x128xi32>
    %133 = arith.cmpi slt, %131, %132 : vector<8x128xi32>
    %cst_17 = arith.constant -1.000000e+30 : f32
    %134 = vector.broadcast %cst_17 : f32 to vector<8x128xf32>
    %135 = arith.select %133, %123, %134 : vector<8x128xi1>, vector<8x128xf32>
    %cst_18 = arith.constant dense<0xFF800000> : vector<8xf32>
    %136 = vector.multi_reduction <maximumf>, %135, %cst_18 [1] : vector<8x128xf32> to vector<8xf32>
    %137 = vector.shape_cast %136 : vector<8xf32> to vector<8x1xf32>
    %cst_19 = arith.constant 1.000000e+30 : f32
    %138 = vector.broadcast %cst_19 : f32 to vector<8x128xf32>
    %139 = arith.select %133, %123, %138 : vector<8x128xi1>, vector<8x128xf32>
    %cst_20 = arith.constant dense<0x7F800000> : vector<8xf32>
    %140 = vector.multi_reduction <minimumf>, %139, %cst_20 [1] : vector<8x128xf32> to vector<8xf32>
    %141 = vector.shape_cast %140 : vector<8xf32> to vector<8x1xf32>
    %142 = arith.subf %137, %141 : vector<8x1xf32>
    %cst_21 = arith.constant -1.000000e+30 : f32
    %143 = vector.broadcast %cst_21 : f32 to vector<8x128xf32>
    %144 = arith.select %133, %124, %143 : vector<8x128xi1>, vector<8x128xf32>
    %cst_22 = arith.constant dense<0xFF800000> : vector<8xf32>
    %145 = vector.multi_reduction <maximumf>, %144, %cst_22 [1] : vector<8x128xf32> to vector<8xf32>
    %146 = vector.shape_cast %145 : vector<8xf32> to vector<8x1xf32>
    %cst_23 = arith.constant 1.000000e+30 : f32
    %147 = vector.broadcast %cst_23 : f32 to vector<8x128xf32>
    %148 = arith.select %133, %124, %147 : vector<8x128xi1>, vector<8x128xf32>
    %cst_24 = arith.constant dense<0x7F800000> : vector<8xf32>
    %149 = vector.multi_reduction <minimumf>, %148, %cst_24 [1] : vector<8x128xf32> to vector<8xf32>
    %150 = vector.shape_cast %149 : vector<8xf32> to vector<8x1xf32>
    %151 = arith.subf %146, %150 : vector<8x1xf32>
    %152 = vector.broadcast %12 : f32 to vector<8x1xf32>
    %153 = arith.mulf %142, %152 : vector<8x1xf32>
    %154 = vector.broadcast %12 : f32 to vector<8x1xf32>
    %155 = arith.mulf %151, %154 : vector<8x1xf32>
    %cst_25 = arith.constant 2.000000e+00 : f32
    %156 = vector.broadcast %cst_25 : f32 to vector<8x1xf32>
    %157 = arith.mulf %153, %156 : vector<8x1xf32>
    %158 = vector.broadcast %157 : vector<8x1xf32> to vector<8x128xf32>
    %159 = arith.mulf %158, %126 : vector<8x128xf32>
    %160 = vector.broadcast %153 : vector<8x1xf32> to vector<8x128xf32>
    %161 = arith.subf %159, %160 : vector<8x128xf32>
    %162 = arith.addf %123, %161 : vector<8x128xf32>
    %cst_26 = arith.constant 2.000000e+00 : f32
    %163 = vector.broadcast %cst_26 : f32 to vector<8x1xf32>
    %164 = arith.mulf %155, %163 : vector<8x1xf32>
    %165 = vector.broadcast %164 : vector<8x1xf32> to vector<8x128xf32>
    %166 = arith.mulf %165, %127 : vector<8x128xf32>
    %167 = vector.broadcast %155 : vector<8x1xf32> to vector<8x128xf32>
    %168 = arith.subf %166, %167 : vector<8x128xf32>
    %169 = arith.addf %124, %168 : vector<8x128xf32>
    %cst_27 = arith.constant 2.000000e+00 : f32
    %170 = arith.mulf %13, %cst_27 : f32
    %171 = vector.broadcast %170 : f32 to vector<8x128xf32>
    %172 = arith.mulf %171, %128 : vector<8x128xf32>
    %173 = vector.broadcast %13 : f32 to vector<8x128xf32>
    %174 = arith.subf %172, %173 : vector<8x128xf32>
    %cst_28 = arith.constant 1.000000e+00 : f32
    %175 = vector.broadcast %cst_28 : f32 to vector<8x128xf32>
    %176 = arith.addf %175, %174 : vector<8x128xf32>
    %177 = arith.mulf %125, %176 : vector<8x128xf32>
    %cst_29 = arith.constant 0.000000e+00 : f32
    %cst_30 = arith.constant 1.000000e+00 : f32
    %178 = vector.broadcast %cst_29 : f32 to vector<8x128xf32>
    %179 = arith.maximumf %178, %177 : vector<8x128xf32>
    %180 = vector.broadcast %cst_30 : f32 to vector<8x128xf32>
    %181 = arith.minimumf %180, %179 : vector<8x128xf32>
    %182 = vector.broadcast %0 : f32 to vector<8x128xf32>
    %183 = arith.mulf %182, %162 : vector<8x128xf32>
    %184 = vector.broadcast %1 : f32 to vector<8x128xf32>
    %185 = arith.mulf %184, %169 : vector<8x128xf32>
    %186 = arith.addf %183, %185 : vector<8x128xf32>
    %187 = vector.broadcast %2 : f32 to vector<8x128xf32>
    %188 = arith.addf %186, %187 : vector<8x128xf32>
    %189 = vector.broadcast %3 : f32 to vector<8x128xf32>
    %190 = arith.mulf %189, %162 : vector<8x128xf32>
    %191 = vector.broadcast %4 : f32 to vector<8x128xf32>
    %192 = arith.mulf %191, %169 : vector<8x128xf32>
    %193 = arith.addf %190, %192 : vector<8x128xf32>
    %194 = vector.broadcast %5 : f32 to vector<8x128xf32>
    %195 = arith.addf %193, %194 : vector<8x128xf32>
    %cst_31 = arith.constant 0.000000e+00 : f32
    %196 = vector.broadcast %cst_31 : f32 to vector<8x128xf32>
    %197 = arith.cmpf oge, %188, %196 : vector<8x128xf32>
    %cst_32 = arith.constant 0.000000e+00 : f32
    %198 = vector.broadcast %cst_32 : f32 to vector<8x128xf32>
    %199 = arith.cmpf oge, %195, %198 : vector<8x128xf32>
    %200 = arith.andi %197, %199 : vector<8x128xi1>
    %201 = vector.broadcast %6 : f32 to vector<8x128xf32>
    %202 = arith.cmpf olt, %188, %201 : vector<8x128xf32>
    %203 = arith.andi %200, %202 : vector<8x128xi1>
    %204 = vector.broadcast %7 : f32 to vector<8x128xf32>
    %205 = arith.cmpf olt, %195, %204 : vector<8x128xf32>
    %206 = arith.andi %203, %205 : vector<8x128xi1>
    %cst_33 = arith.constant 0.000000e+00 : f32
    %207 = vector.broadcast %cst_33 : f32 to vector<8x128xf32>
    %208 = arith.select %206, %181, %207 : vector<8x128xi1>, vector<8x128xf32>
    %cst_34 = arith.constant 2.000000e+00 : f32
    %209 = arith.mulf %11, %cst_34 : f32
    %210 = vector.broadcast %209 : f32 to vector<8x128xf32>
    %211 = arith.mulf %210, %130 : vector<8x128xf32>
    %212 = vector.broadcast %11 : f32 to vector<8x128xf32>
    %213 = arith.subf %211, %212 : vector<8x128xf32>
    %cst_35 = arith.constant 1.000000e+00 : f32
    %214 = vector.broadcast %cst_35 : f32 to vector<8x128xf32>
    %215 = arith.addf %214, %213 : vector<8x128xf32>
    %216 = arith.mulf %129, %215 : vector<8x128xf32>
    %cst_36 = arith.constant 0.000000e+00 : f32
    %cst_37 = arith.constant 1.000000e+00 : f32
    %217 = vector.broadcast %cst_36 : f32 to vector<8x128xf32>
    %218 = arith.maximumf %217, %216 : vector<8x128xf32>
    %219 = vector.broadcast %cst_37 : f32 to vector<8x128xf32>
    %220 = arith.minimumf %219, %218 : vector<8x128xf32>
    %221 = tpu.concatenate %188, %195, %208, %220 in 0 : vector<8x128xf32>, vector<8x128xf32>, vector<8x128xf32>, vector<8x128xf32> -> vector<32x128xf32>
    %c0_38 = arith.constant 0 : index
    %c0_39 = arith.constant 0 : index
    %222 = vector.load %arg4[%c0_38, %c0_39] : memref<32x128xf32, #tpu.memory_space<vmem>>, vector<32x128xf32>
    tpu.vector_store %arg4[%c0_38, %c0_39], %221 {strides = array<i32>} : memref<32x128xf32, #tpu.memory_space<vmem>>, vector<32x128xf32>,
    return
  }
}

</mosaic_0001>

<llo_original>
// kernel: rotate_scale_translate_jitter.1
$region0: #{rotate_scale_translate_jitter.1}
  #allocation0 [shape = 'u32[]', space=smem, size = 0x4, offset = 0x4, fixed_abs, tag = 'smem constant byte address 0x4 - core index']
  #allocation1 [shape = 'u32[144,128]{1,0:T(1,128)}', space=vmem, size = 0x12000, scoped, tag = 'internal scratch']
  %s0 = inlined_call_operand.vmem [shape: f32[14], index: 0, kind: input, shape index: {}]
  %s1 = inlined_call_operand.hbm [shape: f32[16,128], index: 1, kind: input, shape index: {}]
  %s2 = inlined_call_operand.hbm [shape: f32[64,128], index: 2, kind: input, shape index: {}]
  %s3 = inlined_call_operand.hbm [shape: f32[8,128], index: 3, kind: output, shape index: {0}]
  %s4 = inlined_call_operand.hbm [shape: f32[32,128], index: 4, kind: output, shape index: {1}]
  %5 = xla_tuple %s3, %s4
  %s6 = sld [smem:[#allocation0]]
  $region42: #{rotate_scale_translate_jitter.1} parent=0
    _
  %s8 = ssub.s32 1, %s6
  %s9 = scalar_select 0, %s8, %s6
  $region1: #{rotate_scale_translate_jitter.1} parent=0
    #allocation2 [shape = 'u8[512]{0}', space=smem, size = 0x200, scoped, tag = 'input window, operand 0, single buffered']
    #allocation3 [shape = 's32[1]{0}', space=sflag, size = 0x4, scoped, tag = 'scoped memory for rotate_scale_translate_jitter.1']
    #allocation4 [shape = 's32[1]{0}', space=sflag, size = 0x4, scoped, tag = 'scoped memory for rotate_scale_translate_jitter.1']
    #allocation5 [shape = 's32[1]{0}', space=sflag, size = 0x4, scoped, tag = 'scoped memory for rotate_scale_translate_jitter.1']
    #allocation6 [shape = 'u8[8192]{0}', space=vmem, size = 0x2000, scoped, tag = 'input window, operand 1, single buffered']
    #allocation7 [shape = 'u8[32768]{0}', space=vmem, size = 0x8000, scoped, tag = 'input window, operand 2, single buffered']
    #allocation8 [shape = 's32[1]{0}', space=sflag, size = 0x4, scoped, tag = 'scoped memory for rotate_scale_translate_jitter.1']
    #allocation9 [shape = 'u8[4096]{0}', space=vmem, size = 0x1000, scoped, tag = 'output window, operand 0, single buffered']
    #allocation10 [shape = 'u8[16384]{0}', space=vmem, size = 0x4000, scoped, tag = 'output window, operand 1, single buffered']
    #allocation11 [shape = 's32[1]{0}', space=sflag, size = 0x4, scoped, tag = 'scoped memory for rotate_scale_translate_jitter.1']
    %10 = vsyncpa [#allocation5], 0
    %11 = vsyncpa [#allocation3], 0
    %12 = vsyncpa [#allocation8], 0
    %13 = vsyncpa [#allocation4], 0
    %14 = vsyncpa [#allocation11], 0
    // Predicated region
    $region2: #{rotate_scale_translate_jitter.1} parent=1 // pred_check
      _
    $region3: #{rotate_scale_translate_jitter.1} parent=1 // pred_check_branch
      %16 = sbr.rel (0) target = $region5
    $region4: #{rotate_scale_translate_jitter.1} parent=1 // pred_region
      %s18 = ssub.s32 16, 16
      %19 = vsyncadd [#allocation5], %s18
      %s21 = sshll.u32 %s0, 4
      %s22 = int_to_ptr.vmem [resolvable:$true] %s21
      %24 = dma.vmem_to_smem %s22, 16, [#allocation2], [#allocation5]
    $region5: #{rotate_scale_translate_jitter.1} parent=1 // pred_fallthru
      _
    // Predicated region
    $region6: #{rotate_scale_translate_jitter.1} parent=1 // pred_check
      _
    $region7: #{rotate_scale_translate_jitter.1} parent=1 // pred_check_branch
      %26 = sbr.rel (0) target = $region9
    $region8: #{rotate_scale_translate_jitter.1} parent=1 // pred_region
      %s28 = ssub.s32 256, 256
      %29 = vsyncadd [#allocation3], %s28
      %s30 = sshll.u32 [#allocation6], 4
      %s31 = int_to_ptr.vmem [resolvable:$true] %s30
      %36 = dma.hbm_to_vmem [thread:$0]  %s1, 256, %s31, [#allocation3], 128, 128, 8
    $region9: #{rotate_scale_translate_jitter.1} parent=1 // pred_fallthru
      _
    // Predicated region
    $region10: #{rotate_scale_translate_jitter.1} parent=1 // pred_check
      _
    $region11: #{rotate_scale_translate_jitter.1} parent=1 // pred_check_branch
      %38 = sbr.rel (0) target = $region13
    $region12: #{rotate_scale_translate_jitter.1} parent=1 // pred_region
      %s40 = ssub.s32 1024, 1024
      %41 = vsyncadd [#allocation8], %s40
      %s42 = sshll.u32 [#allocation7], 4
      %s43 = int_to_ptr.vmem [resolvable:$true] %s42
      %48 = dma.hbm_to_vmem [thread:$0]  %s2, 1024, %s43, [#allocation8], 128, 128, 8
    $region13: #{rotate_scale_translate_jitter.1} parent=1 // pred_fallthru
      _
    // Predicated region
    $region14: #{rotate_scale_translate_jitter.1} parent=1 // pred_check
      _
    $region15: #{rotate_scale_translate_jitter.1} parent=1 // pred_check_branch
      %50 = sbr.rel (0) target = $region17
    $region16: #{rotate_scale_translate_jitter.1} parent=1 // pred_region
      %51 = dma.done [#allocation5], 16
    $region17: #{rotate_scale_translate_jitter.1} parent=1 // pred_fallthru
      _
    // Predicated region
    $region18: #{rotate_scale_translate_jitter.1} parent=1 // pred_check
      _
    $region19: #{rotate_scale_translate_jitter.1} parent=1 // pred_check_branch
      %53 = sbr.rel (0) target = $region21
    $region20: #{rotate_scale_translate_jitter.1} parent=1 // pred_region
      %54 = dma.done [#allocation3], 256
    $region21: #{rotate_scale_translate_jitter.1} parent=1 // pred_fallthru
      _
    // Predicated region
    $region22: #{rotate_scale_translate_jitter.1} parent=1 // pred_check
      _
    $region23: #{rotate_scale_translate_jitter.1} parent=1 // pred_check_branch
      %56 = sbr.rel (0) target = $region25
    $region24: #{rotate_scale_translate_jitter.1} parent=1 // pred_region
      %57 = dma.done [#allocation8], 1024
    $region25: #{rotate_scale_translate_jitter.1} parent=1 // pred_fallthru
      _
    %58 = sfence
    %s59 = sld [smem:[#allocation2]]
    %s60 = sld [smem:[#allocation2 + $0x1]]
    %s61 = sld [smem:[#allocation2 + $0x2]]
    %s62 = sld [smem:[#allocation2 + $0x3]]
    %s63 = sld [smem:[#allocation2 + $0x4]]
    %s64 = sld [smem:[#allocation2 + $0x5]]
    %s65 = sld [smem:[#allocation2 + $0x6]]
    %s66 = sld [smem:[#allocation2 + $0x7]]
    %s67 = sld [smem:[#allocation2 + $0x8]]
    %s68 = sld [smem:[#allocation2 + $0x9]]
    %s69 = sld [smem:[#allocation2 + $0xa]]
    %s70 = sld [smem:[#allocation2 + $0xb]]
    %s71 = sld [smem:[#allocation2 + $0xc]]
    %s72 = sld [smem:[#allocation2 + $0xd]]
    %v73 = vld [vmem:[#allocation6] sm:$0xff]
    %v74 = vld [vmem:[#allocation6 + $0x8] sm:$0xff]
    %v75 = vstv %s67
    %v76 = vmul.f32 %v73, %v75
    %v77 = vmul.f32 %v76, 2.0
    %v79 = vrot.slane %v73, 3
    %v81 = vmul.f32 %v77, %v79
    %v82 = vsub.f32 %v81, %v76
    %v84 = vrot.slane %v82, 2
    %v86 = vadd.f32 %v73, %v84
    %v87 = vstv %s68
    %v88 = vmul.f32 %v73, %v87
    %v89 = vmul.f32 %v88, 2.0
    %v90 = vrot.slane %v73, 5
    %v92 = vmul.f32 %v89, %v90
    %v93 = vsub.f32 %v92, %v88
    %v94 = vadd.f32 %v73, %v93
    %v96 = vrot.slane %v74, 5
    %v98 = vmul.f32 %v89, %v96
    %v99 = vsub.f32 %v98, %v88
    %v100 = vadd.f32 %v73, %v99
    %s101 = smul.f32 %s69, 2.0
    %v102 = vstv %s101
    %v103 = vmul.f32 %v102, %v74
    %v104 = vstv %s69
    %v105 = vsub.f32 %v103, %v104
    %v106 = vadd.f32 %v105, 1.0
    %v108 = vrot.slane %v106, 5
    %v110 = vmul.f32 %v73, %v108
    %v111 = vmax.f32 %v110, 0.0
    %v112 = vmin.f32 %v111, 1.0
    %v113 = vstv %s59
    %v114 = vmul.f32 %v113, %v86
    %v115 = vstv %s60
    %v116 = vmul.f32 %v115, %v86
    %v118 = vrot.slane %v116, 1
    %v120 = vadd.f32 %v114, %v118
    %v121 = vstv %s61
    %v122 = vadd.f32 %v120, %v121
    %v123 = vstv %s62
    %v124 = vmul.f32 %v123, %v86
    %v125 = vstv %s63
    %v126 = vmul.f32 %v125, %v86
    %v128 = vrot.slane %v126, 1
    %v130 = vadd.f32 %v124, %v128
    %v131 = vstv %s64
    %v132 = vadd.f32 %v130, %v131
    %v133 = vmul.f32 %v113, %v94
    %v134 = vmul.f32 %v115, %v100
    %v135 = vmul.f32 %v123, %v94
    %v136 = vmul.f32 %v125, %v100
    %v137 = vmin.f32 %v133, 0.0
    %v139 = vrot.slane %v137, 2
    %v141 = vadd.f32 %v122, %v139
    %v142 = vmin.f32 %v134, 0.0
    %v144 = vrot.slane %v142, 3
    %v146 = vadd.f32 %v141, %v144
    %v147 = vmax.f32 %v133, 0.0
    %v149 = vrot.slane %v147, 2
    %v151 = vadd.f32 %v122, %v149
    %v152 = vmax.f32 %v134, 0.0
    %v154 = vrot.slane %v152, 3
    %v156 = vadd.f32 %v151, %v154
    %v157 = vmin.f32 %v135, 0.0
    %v159 = vrot.slane %v157, 2
    %v161 = vadd.f32 %v132, %v159
    %v162 = vmin.f32 %v136, 0.0
    %v164 = vrot.slane %v162, 3
    %v166 = vadd.f32 %v161, %v164
    %v167 = vmax.f32 %v135, 0.0
    %v169 = vrot.slane %v167, 2
    %v171 = vadd.f32 %v132, %v169
    %v172 = vmax.f32 %v136, 0.0
    %v174 = vrot.slane %v172, 3
    %v176 = vadd.f32 %v171, %v174
    %vm177 = vcmp.gt.f32.partialorder %v156, 0.0
    %vm178 = vcmp.gt.f32.partialorder %v176, 0.0
    %vm179 = vmand %vm177, %vm178
    %v180 = vstv %s65
    %vm181 = vcmp.lt.f32.partialorder %v146, %v180
    %vm182 = vmand %vm179, %vm181
    %v183 = vstv %s66
    %vm184 = vcmp.lt.f32.partialorder %v166, %v183
    %vm185 = vmand %vm182, %vm184
    %v186 = vsel %vm185, 1, 0
    %v187 = vcvt.s32.f32 %v186
    %v188 = vsub.f32 %v156, %v146
    %v189 = vsub.f32 %v176, %v166
    %v191 = vrot.slane %v166, 7
    %v194 = vrot.slane %v188, 6
    %v197 = vrot.slane %v189, 5
    %v200 = vrot.slane %v187, 3
    %vm202 = vcmask 1040384
    %v203 = vsel %vm202, %v146, %v191
    %vm204 = vcmask 1041408
    %v205 = vsel %vm204, %v203, %v194
    %vm206 = vcmask 1042432
    %v207 = vsel %vm206, %v205, %v197
    %vm208 = vcmask 1043456
    %v209 = vsel %vm208, %v207, %v112
    %vm210 = vcmask 1044480
    %v211 = vsel %vm210, %v209, %v200
    %vm212 = vcmask 1045504
    %v213 = vsel %vm212, %v211, 0.0
    %vm214 = vcmask 1046528
    %v215 = vsel %vm214, %v213, 0.0
    %216 = vst [vmem:[#allocation9] sm:$0xff] %v215
    %v217 = vld [vmem:[#allocation7] sm:$0xff]
    %v218 = vld [vmem:[#allocation7 + $0x8] sm:$0xff]
    %v219 = vld [vmem:[#allocation7 + $0x10] sm:$0xff]
    %v220 = vld [vmem:[#allocation7 + $0x18] sm:$0xff]
    %v221 = vld [vmem:[#allocation7 + $0x20] sm:$0xff]
    %v222 = vld [vmem:[#allocation7 + $0x28] sm:$0xff]
    %v223 = vld [vmem:[#allocation7 + $0x30] sm:$0xff]
    %v224 = vld [vmem:[#allocation7 + $0x38] sm:$0xff]
    %v225 = vlaneseq
    %v226 = vand.u32 %v225, 127
    %vm227 = vcmp.lt.s32.totalorder %v226, 8
    %v228 = vsel %vm227, %v217, -1e+30
    %229 = vmax.xlane.f32.xlu0 %v228
    %v230 = vpop.xlane.xlu0 %229
    %v231 = vsel %vm227, %v217, 1e+30
    %232 = vmin.xlane.f32.xlu0 %v231
    %v233 = vpop.xlane.xlu0 %232
    %v234 = vsub.f32 %v230, %v233
    %v235 = vsel %vm227, %v218, -1e+30
    %236 = vmax.xlane.f32.xlu0 %v235
    %v237 = vpop.xlane.xlu0 %236
    %v238 = vsel %vm227, %v218, 1e+30
    %239 = vmin.xlane.f32.xlu0 %v238
    %v240 = vpop.xlane.xlu0 %239
    %v241 = vsub.f32 %v237, %v240
    %v242 = vstv %s71
    %v243 = vmul.f32 %v234, %v242
    %v244 = vmul.f32 %v241, %v242
    %v245 = vmul.f32 %v243, 2.0
    %v246 = vmul.f32 %v245, %v220
    %v247 = vsub.f32 %v246, %v243
    %v248 = vadd.f32 %v217, %v247
    %v249 = vmul.f32 %v244, 2.0
    %v250 = vmul.f32 %v249, %v221
    %v251 = vsub.f32 %v250, %v244
    %v252 = vadd.f32 %v218, %v251
    %s253 = smul.f32 %s72, 2.0
    %v254 = vstv %s253
    %v255 = vmul.f32 %v254, %v222
    %v256 = vstv %s72
    %v257 = vsub.f32 %v255, %v256
    %v258 = vadd.f32 %v257, 1.0
    %v259 = vmul.f32 %v219, %v258
    %v260 = vmax.f32 %v259, 0.0
    %v261 = vmin.f32 %v260, 1.0
    %v262 = vmul.f32 %v113, %v248
    %v263 = vmul.f32 %v115, %v252
    %v264 = vadd.f32 %v262, %v263
    %v265 = vadd.f32 %v264, %v121
    %v266 = vmul.f32 %v123, %v248
    %v267 = vmul.f32 %v125, %v252
    %v268 = vadd.f32 %v266, %v267
    %v269 = vadd.f32 %v268, %v131
    %vm270 = vcmp.ge.f32.partialorder %v265, 0.0
    %vm271 = vcmp.ge.f32.partialorder %v269, 0.0
    %vm272 = vmand %vm270, %vm271
    %vm273 = vcmp.lt.f32.partialorder %v265, %v180
    %vm274 = vmand %vm272, %vm273
    %vm275 = vcmp.lt.f32.partialorder %v269, %v183
    %vm276 = vmand %vm274, %vm275
    %v277 = vsel %vm276, %v261, 0.0
    %s278 = smul.f32 %s70, 2.0
    %v279 = vstv %s278
    %v280 = vmul.f32 %v279, %v224
    %v281 = vstv %s70
    %v282 = vsub.f32 %v280, %v281
    %v283 = vadd.f32 %v282, 1.0
    %v284 = vmul.f32 %v223, %v283
    %v285 = vmax.f32 %v284, 0.0
    %v286 = vmin.f32 %v285, 1.0
    %287 = vst [vmem:[#allocation10] sm:$0xff] %v265
    %288 = vst [vmem:[#allocation10 + $0x8] sm:$0xff] %v269
    %289 = vst [vmem:[#allocation10 + $0x10] sm:$0xff] %v277
    %290 = vst [vmem:[#allocation10 + $0x18] sm:$0xff] %v286
    // Predicated region
    $region26: #{rotate_scale_translate_jitter.1} parent=1 // pred_check
      _
    $region27: #{rotate_scale_translate_jitter.1} parent=1 // pred_check_branch
      %292 = sbr.rel (0) target = $region29
    $region28: #{rotate_scale_translate_jitter.1} parent=1 // pred_region
      %s294 = ssub.s32 128, 128
      %295 = vsyncadd [#allocation4], %s294
      %s297 = sshll.u32 [#allocation9], 4
      %s298 = int_to_ptr.vmem [resolvable:$true] %s297
      %300 = dma.vmem_to_hbm [thread:$0]  %s298, 128, %s3, [#allocation4]
    $region29: #{rotate_scale_translate_jitter.1} parent=1 // pred_fallthru
      _
    // Predicated region
    $region30: #{rotate_scale_translate_jitter.1} parent=1 // pred_check
      _
    $region31: #{rotate_scale_translate_jitter.1} parent=1 // pred_check_branch
      %302 = sbr.rel (0) target = $region33
    $region32: #{rotate_scale_translate_jitter.1} parent=1 // pred_region
      %s304 = ssub.s32 512, 512
      %305 = vsyncadd [#allocation11], %s304
      %s306 = sshll.u32 [#allocation10], 4
      %s307 = int_to_ptr.vmem [resolvable:$true] %s306
      %312 = dma.vmem_to_hbm [thread:$0]  %s307, 512, %s4, [#allocation11], 128, 128, 8
    $region33: #{rotate_scale_translate_jitter.1} parent=1 // pred_fallthru
      _
    // Predicated region
    $region34: #{rotate_scale_translate_jitter.1} parent=1 // pred_check
      _
    $region35: #{rotate_scale_translate_jitter.1} parent=1 // pred_check_branch
      %314 = sbr.rel (0) target = $region37
    $region36: #{rotate_scale_translate_jitter.1} parent=1 // pred_region
      %315 = dma.done [#allocation4], 128
    $region37: #{rotate_scale_translate_jitter.1} parent=1 // pred_fallthru
      _
    // Predicated region
    $region38: #{rotate_scale_translate_jitter.1} parent=1 // pred_check
      _
    $region39: #{rotate_scale_translate_jitter.1} parent=1 // pred_check_branch
      %317 = sbr.rel (0) target = $region41
    $region40: #{rotate_scale_translate_jitter.1} parent=1 // pred_region
      %318 = dma.done [#allocation11], 512
    $region41: #{rotate_scale_translate_jitter.1} parent=1 // pred_fallthru
      _
    %319 = vsyncpa [#allocation3], 1
    %320 = vsyncpa [#allocation8], 1
    %321 = vsyncpa [#allocation4], 1
    %322 = vsyncpa [#allocation11], 1
    %323 = vsyncpa [#allocation5], 1

</llo_original>
